<compile_context>
chip_gen: v6e
topology: v6e:2x2x1
jax: 0.10.0
libtpu: 0.0.40
codegen_flags: <defaults>
</compile_context>

<pallas_src>
import functools
import math

import jax
import jax.numpy as jnp
from jax import lax
from jax.experimental import pallas as pl
from jax.experimental.pallas import tpu as pltpu

_MASK_FILL = -1e9          # Python float -> lowered as a literal (no captured const)
_MiB = 1024 * 1024


# ----------------------------------------------------------------------------
# Kernels
# ----------------------------------------------------------------------------
def _attn_kernel(*refs, has_mask):
    """Full-softmax attention over one query tile; also writes p_attn."""
    if has_mask:
        q_ref, k_ref, v_ref, m_ref, o_ref, p_ref = refs
    else:
        q_ref, k_ref, v_ref, o_ref, p_ref = refs
        m_ref = None
    # Fold 1/sqrt(D) into q: (TQ, D) multiply instead of scaling (TQ, S) scores.
    scale = 1.0 / math.sqrt(q_ref.shape[-1])
    q = q_ref[0] * scale                                   # input dtype (MXU-native)
    # QK^T via dot_general contracting dim 1 of both (no K transpose), f32 accum.
    scores = lax.dot_general(q, k_ref[0], (((1,), (1,)), ((), ())),
                             preferred_element_type=jnp.float32)
    if has_mask:
        scores = jnp.where(m_ref[0] == 0, _MASK_FILL, scores)
    m = jnp.max(scores, axis=-1, keepdims=True)
    e = jnp.exp(scores - m)
    denom = jnp.sum(e, axis=-1, keepdims=True)
    # (TQ,1) reciprocal is cheap either way; keep it exact for f32 p_attn.
    approx = p_ref.dtype != jnp.float32
    p = e * pl.reciprocal(denom, approx=approx)
    # Single cast shared by the p_attn store and the PV matmul.
    p_out = p.astype(p_ref.dtype)
    p_ref[0] = p_out
    o_ref[0] = jnp.dot(p_out, v_ref[0],
                       preferred_element_type=jnp.float32).astype(o_ref.dtype)


def _flash_kernel(*refs, has_mask):
    """Online-softmax (flash) attention; no p_attn output, KV tiled on grid axis 2."""
    if has_mask:
        q_ref, k_ref, v_ref, m_ref, o_ref, m_sc, l_sc, acc_sc = refs
    else:
        q_ref, k_ref, v_ref, o_ref, m_sc, l_sc, acc_sc = refs
        m_ref = None
    ki = pl.program_id(2)

    @pl.when(ki == 0)
    def _init():
        m_sc[...] = jnp.full_like(m_sc, -jnp.inf)
        l_sc[...] = jnp.zeros_like(l_sc)
        acc_sc[...] = jnp.zeros_like(acc_sc)

    scale = 1.0 / math.sqrt(q_ref.shape[-1])
    q = q_ref[0] * scale
    s = lax.dot_general(q, k_ref[0], (((1,), (1,)), ((), ())),
                        preferred_element_type=jnp.float32)
    if has_mask:
        s = jnp.where(m_ref[0] == 0, _MASK_FILL, s)
    m_new = jnp.maximum(m_sc[...], jnp.max(s, axis=-1, keepdims=True))
    alpha = jnp.exp(m_sc[...] - m_new)
    p = jnp.exp(s - m_new)
    l_sc[...] = alpha * l_sc[...] + jnp.sum(p, axis=-1, keepdims=True)
    acc_sc[...] = alpha * acc_sc[...] + jnp.dot(
        p.astype(v_ref.dtype), v_ref[0], preferred_element_type=jnp.float32)
    m_sc[...] = m_new

    @pl.when(ki == pl.num_programs(2) - 1)
    def _finalize():
        approx = o_ref.dtype != jnp.float32
        o_ref[0] = (acc_sc[...] * pl.reciprocal(l_sc[...], approx=approx)
                    ).astype(o_ref.dtype)


# ----------------------------------------------------------------------------
# Wrapper
# ----------------------------------------------------------------------------
def _pick_tile(size, target):
    """Largest tile <= target that divides `size` and is sublane-friendly."""
    t = max(1, min(target, size))
    for cand in range(t, 0, -1):
        if size % cand == 0 and (cand % 8 == 0 or cand == size):
            return cand
    return size


def _device_defaults():
    """(tq_target, vmem_limit_bytes) per TPU generation."""
    kind = ""
    try:
        kind = jax.devices()[0].device_kind.lower()
    except Exception:
        pass
    if "v5" in kind:
        return 128, 100 * _MiB     # 4x128 MXU; 128 MiB physical VMEM
    if "v6" in kind:
        return 256, 100 * _MiB     # 256x256 MXU; 128 MiB physical VMEM
    # v7x (64 MiB physical per TC) or unknown: stay conservative.
    return 256, 48 * _MiB


def _p_path_vmem_estimate(S, D, TQ, itemsize, has_mask):
    kv = 2 * 2 * S * D * itemsize          # K and V, double-buffered
    q_o = 2 * 2 * TQ * D * itemsize        # q in + o out tiles
    p = 2 * TQ * S * itemsize              # p_attn writeback tile
    msk = 2 * TQ * S if has_mask else 0    # int8 mask tile
    f32_tmp = 4 * TQ * S * 4               # f32 scores / exp intermediates
    return kv + q_o + p + msk + f32_tmp + 4 * _MiB


def attention(query, key, value, mask=None, *, return_p_attn=True,
              tq_target=None, tk_target=512):
    """Pallas scaled dot-product attention. query/key/value: [BH, S, D].

    return_p_attn=True  -> (output, p_attn), matching the PyTorch module.
    return_p_attn=False -> output only, via a flash-style kernel (no O(S^2) HBM).
    """
    BH, S, D = query.shape
    tq_def, vmem_limit = _device_defaults()
    if tq_target is None:
        tq_target = tq_def
    TQ = _pick_tile(S, tq_target)

    if mask is not None and mask.dtype.itemsize > 1:
        # 1-byte mask: 4x less HBM/VMEM traffic than int32.
        mask = (mask != 0).astype(jnp.int8)
    has_mask = mask is not None
    itemsize = jnp.dtype(query.dtype).itemsize

    if return_p_attn:
        # Shrink TQ until the estimated working set fits the per-chip budget.
        while TQ > 8:
            if _p_path_vmem_estimate(S, D, TQ, itemsize, has_mask) <= vmem_limit:
                break
            new_tq = _pick_tile(S, max(TQ // 2, 8))
            if new_tq >= TQ:
                break
            TQ = new_tq
        n_qt = S // TQ

        out_shapes = (
            jax.ShapeDtypeStruct((BH, S, D), query.dtype),
            jax.ShapeDtypeStruct((BH, S, S), query.dtype),
        )
        q_spec = pl.BlockSpec((1, TQ, D), lambda b, t: (b, t, 0))
        kv_spec = pl.BlockSpec((1, S, D), lambda b, t: (b, 0, 0))   # resident over qt
        in_specs = [q_spec, kv_spec, kv_spec]
        operands = [query, key, value]
        if has_mask:
            in_specs.append(pl.BlockSpec((1, TQ, S), lambda b, t: (b, t, 0)))
            operands.append(mask)
        out_specs = (
            pl.BlockSpec((1, TQ, D), lambda b, t: (b, t, 0)),
            pl.BlockSpec((1, TQ, S), lambda b, t: (b, t, 0)),
        )
        return pl.pallas_call(
            functools.partial(_attn_kernel, has_mask=has_mask),
            out_shape=out_shapes,
            grid_spec=pltpu.PrefetchScalarGridSpec(
                num_scalar_prefetch=0,
                grid=(BH, n_qt),
                in_specs=in_specs,
                out_specs=out_specs,
            ),
            compiler_params=pltpu.CompilerParams(
                dimension_semantics=("parallel", "parallel"),
                vmem_limit_bytes=vmem_limit,
            ),
        )(*operands)

    # Flash path: KV tiled on an "arbitrary" inner grid axis, O(TQ*D + TK*D) VMEM.
    TK = _pick_tile(S, tk_target)
    n_qt = S // TQ
    n_kt = S // TK
    q_spec = pl.BlockSpec((1, TQ, D), lambda b, qi, ki: (b, qi, 0))
    kv_spec = pl.BlockSpec((1, TK, D), lambda b, qi, ki: (b, ki, 0))
    o_spec = pl.BlockSpec((1, TQ, D), lambda b, qi, ki: (b, qi, 0))
    in_specs = [q_spec, kv_spec, kv_spec]
    operands = [query, key, value]
    if has_mask:
        in_specs.append(pl.BlockSpec((1, TQ, TK), lambda b, qi, ki: (b, qi, ki)))
        operands.append(mask)
    return pl.pallas_call(
        functools.partial(_flash_kernel, has_mask=has_mask),
        out_shape=jax.ShapeDtypeStruct((BH, S, D), query.dtype),
        grid_spec=pltpu.PrefetchScalarGridSpec(
            num_scalar_prefetch=0,
            grid=(BH, n_qt, n_kt),
            in_specs=in_specs,
            out_specs=o_spec,
            scratch_shapes=[
                pltpu.VMEM((TQ, 1), jnp.float32),   # running max m
                pltpu.VMEM((TQ, 1), jnp.float32),   # running denom l
                pltpu.VMEM((TQ, D), jnp.float32),   # running accumulator
            ],
        ),
        compiler_params=pltpu.CompilerParams(
            dimension_semantics=("parallel", "parallel", "arbitrary"),
            vmem_limit_bytes=vmem_limit,
        ),
    )(*operands)


# ----------------------------------------------------------------------------
# Reference + test
# ----------------------------------------------------------------------------
def _reference(query, key, value, mask=None):
    d = query.shape[-1]
    scores = jnp.einsum("bqd,bkd->bqk", query, key) / math.sqrt(d)
    if mask is not None:
        scores = jnp.where(mask == 0, -1e9, scores)
    p = jax.nn.softmax(scores, axis=-1)
    return jnp.einsum("bqk,bkd->bqd", p, value), p


if __name__ == "__main__":
    # small shapes: batch=2, heads=2 -> BH=4, seq=8, head_dim=32
    B, H, S, D = 2, 2, 8, 32
    BH = B * H
    key0 = jax.random.PRNGKey(0)
    kq, kk, kv, km = jax.random.split(key0, 4)
    q = jax.random.normal(kq, (BH, S, D), dtype=jnp.float32)
    k = jax.random.normal(kk, (BH, S, D), dtype=jnp.float32)
    v = jax.random.normal(kv, (BH, S, D), dtype=jnp.float32)
    # mask supplied as int8 (callers should pass bool/int8 to avoid extra HBM traffic)
    mask = (jax.random.uniform(km, (BH, S, S)) > 0.3).astype(jnp.int8)

    ref_out, ref_p = _reference(q, k, v)
    ref_out_m, ref_p_m = _reference(q, k, v, mask)

    # p_attn-returning path (module semantics), no mask
    out, p_attn = attention(q, k, v)
    jax.block_until_ready((out, p_attn))
    assert jnp.allclose(out, ref_out, atol=2e-3, rtol=2e-3), "output mismatch (no mask)"
    assert jnp.allclose(p_attn, ref_p, atol=2e-3, rtol=2e-3), "p_attn mismatch (no mask)"

    # p_attn-returning path, masked
    out_m, p_m = attention(q, k, v, mask)
    jax.block_until_ready((out_m, p_m))
    assert jnp.allclose(out_m, ref_out_m, atol=2e-3, rtol=2e-3), "output mismatch (mask)"
    assert jnp.allclose(p_m, ref_p_m, atol=2e-3, rtol=2e-3), "p_attn mismatch (mask)"

    # flash path (output only), no mask
    out_f = attention(q, k, v, return_p_attn=False)
    jax.block_until_ready(out_f)
    assert jnp.allclose(out_f, ref_out, atol=2e-3, rtol=2e-3), "flash output mismatch (no mask)"

    # flash path, masked
    out_fm = attention(q, k, v, mask, return_p_attn=False)
    jax.block_until_ready(out_fm)
    assert jnp.allclose(out_fm, ref_out_m, atol=2e-3, rtol=2e-3), "flash output mismatch (mask)"

    print("KERNEL_OK")
</pallas_src>

<mosaic_0001>
module attributes {stable_mosaic.version = 11 : i64} {
  func.func @_attn_kernel(%arg0: i32, %arg1: i32, %arg2: memref<1x8x32xf32, #tpu.memory_space<vmem>>, %arg3: memref<1x8x32xf32, #tpu.memory_space<vmem>>, %arg4: memref<1x8x32xf32, #tpu.memory_space<vmem>>, %arg5: memref<1x8x32xf32, #tpu.memory_space<vmem>>, %arg6: memref<1x8x8xf32, #tpu.memory_space<vmem>>) attributes {dimension_semantics = [#tpu.dimension_semantics<parallel>, #tpu.dimension_semantics<parallel>], iteration_bounds = array<i64: 4, 1>, scalar_prefetch = 0 : i64, scratch_operands = 0 : i64, tpu.core_type = #tpu.core_type<tc>, window_params = [{transform_indices = @transform_0, window_bounds = array<i64: 1, 8, 32>}, {transform_indices = @transform_1, window_bounds = array<i64: 1, 8, 32>}, {transform_indices = @transform_2, window_bounds = array<i64: 1, 8, 32>}, {transform_indices = @transform_3, window_bounds = array<i64: 1, 8, 32>}, {transform_indices = @transform_4, window_bounds = array<i64: 1, 8, 8>}]} {
    %c0 = arith.constant 0 : index
    %c0_0 = arith.constant 0 : index
    %c0_1 = arith.constant 0 : index
    %0 = vector.load %arg2[%c0, %c0_0, %c0_1] : memref<1x8x32xf32, #tpu.memory_space<vmem>>, vector<1x8x32xf32>
    %1 = vector.shape_cast %0 : vector<1x8x32xf32> to vector<8x32xf32>
    %cst = arith.constant 0.176776692 : f32
    %2 = vector.broadcast %cst : f32 to vector<8x32xf32>
    %3 = arith.mulf %1, %2 : vector<8x32xf32>
    %c0_2 = arith.constant 0 : index
    %c0_3 = arith.constant 0 : index
    %c0_4 = arith.constant 0 : index
    %4 = vector.load %arg3[%c0_2, %c0_3, %c0_4] : memref<1x8x32xf32, #tpu.memory_space<vmem>>, vector<1x8x32xf32>
    %5 = vector.shape_cast %4 : vector<1x8x32xf32> to vector<8x32xf32>
    %cst_5 = arith.constant dense<0.000000e+00> : vector<8x8xf32>
    %6 = tpu.matmul %3, %5, %cst_5 {dimension_numbers = #tpu.dot_dimension_numbers<[1], [1], [0], [0], [0, 0, 1, 0], [], []>} : vector<8x32xf32>, vector<8x32xf32>, vector<8x8xf32> -> vector<8x8xf32>
    %cst_6 = arith.constant dense<0xFF800000> : vector<8xf32>
    %7 = vector.multi_reduction <maximumf>, %6, %cst_6 [1] : vector<8x8xf32> to vector<8xf32>
    %8 = vector.shape_cast %7 : vector<8xf32> to vector<8x1xf32>
    %9 = vector.broadcast %8 : vector<8x1xf32> to vector<8x8xf32>
    %10 = arith.subf %6, %9 : vector<8x8xf32>
    %11 = math.exp %10 : vector<8x8xf32>
    %cst_7 = arith.constant dense<0.000000e+00> : vector<8xf32>
    %12 = vector.multi_reduction <add>, %11, %cst_7 [1] : vector<8x8xf32> to vector<8xf32>
    %13 = vector.shape_cast %12 : vector<8xf32> to vector<8x1xf32>
    %14 = tpu.reciprocal %13 : vector<8x1xf32> -> vector<8x1xf32>
    %15 = vector.broadcast %14 : vector<8x1xf32> to vector<8x8xf32>
    %16 = arith.mulf %11, %15 : vector<8x8xf32>
    %c0_8 = arith.constant 0 : index
    %c0_9 = arith.constant 0 : index
    %c0_10 = arith.constant 0 : index
    %17 = vector.load %arg6[%c0_8, %c0_9, %c0_10] : memref<1x8x8xf32, #tpu.memory_space<vmem>>, vector<1x8x8xf32>
    %18 = vector.shape_cast %17 : vector<1x8x8xf32> to vector<8x8xf32>
    %19 = vector.shape_cast %16 : vector<8x8xf32> to vector<1x8x8xf32>
    tpu.vector_store %arg6[%c0_8, %c0_9, %c0_10], %19 {strides = array<i32>} : memref<1x8x8xf32, #tpu.memory_space<vmem>>, vector<1x8x8xf32>,
    %c0_11 = arith.constant 0 : index
    %c0_12 = arith.constant 0 : index
    %c0_13 = arith.constant 0 : index
    %20 = vector.load %arg4[%c0_11, %c0_12, %c0_13] : memref<1x8x32xf32, #tpu.memory_space<vmem>>, vector<1x8x32xf32>
    %21 = vector.shape_cast %20 : vector<1x8x32xf32> to vector<8x32xf32>
    %cst_14 = arith.constant dense<0.000000e+00> : vector<8x32xf32>
    %22 = tpu.matmul %16, %21, %cst_14 {dimension_numbers = #tpu.dot_dimension_numbers<[1], [0], [0], [1], [0, 0, 1, 1], [], []>} : vector<8x8xf32>, vector<8x32xf32>, vector<8x32xf32> -> vector<8x32xf32>
    %c0_15 = arith.constant 0 : index
    %c0_16 = arith.constant 0 : index
    %c0_17 = arith.constant 0 : index
    %23 = vector.load %arg5[%c0_15, %c0_16, %c0_17] : memref<1x8x32xf32, #tpu.memory_space<vmem>>, vector<1x8x32xf32>
    %24 = vector.shape_cast %23 : vector<1x8x32xf32> to vector<8x32xf32>
    %25 = vector.shape_cast %22 : vector<8x32xf32> to vector<1x8x32xf32>
    tpu.vector_store %arg5[%c0_15, %c0_16, %c0_17], %25 {strides = array<i32>} : memref<1x8x32xf32, #tpu.memory_space<vmem>>, vector<1x8x32xf32>,
    return
  }
  func.func @transform_0(%arg0: i32, %arg1: i32) -> (i32, i32, i32) {
    %c0_i32 = arith.constant 0 : i32
    %c0_i32_0 = arith.constant 0 : i32
    return %arg0, %arg1, %c0_i32 : i32, i32, i32
  }
  func.func @transform_1(%arg0: i32, %arg1: i32) -> (i32, i32, i32) {
    %c0_i32 = arith.constant 0 : i32
    %c0_i32_0 = arith.constant 0 : i32
    %c0_i32_1 = arith.constant 0 : i32
    return %arg0, %c0_i32, %c0_i32_0 : i32, i32, i32
  }
  func.func @transform_2(%arg0: i32, %arg1: i32) -> (i32, i32, i32) {
    %c0_i32 = arith.constant 0 : i32
    %c0_i32_0 = arith.constant 0 : i32
    %c0_i32_1 = arith.constant 0 : i32
    return %arg0, %c0_i32, %c0_i32_0 : i32, i32, i32
  }
  func.func @transform_3(%arg0: i32, %arg1: i32) -> (i32, i32, i32) {
    %c0_i32 = arith.constant 0 : i32
    %c0_i32_0 = arith.constant 0 : i32
    return %arg0, %arg1, %c0_i32 : i32, i32, i32
  }
  func.func @transform_4(%arg0: i32, %arg1: i32) -> (i32, i32, i32) {
    %c0_i32 = arith.constant 0 : i32
    %c0_i32_0 = arith.constant 0 : i32
    return %arg0, %arg1, %c0_i32 : i32, i32, i32
  }
}

</mosaic_0001>

<llo_original>
// kernel: tpu_custom_call.1
$region0: #{tpu_custom_call.1}
  #allocation0 [shape = 'u32[]', space=smem, size = 0x4, offset = 0x4, fixed_abs, tag = 'smem constant byte address 0x4 - core index']
  #allocation1 [shape = 'u32[144,128]{1,0:T(1,128)}', space=vmem, size = 0x12000, scoped, tag = 'internal scratch']
  %s0 = inlined_call_operand.hbm [shape: f32[4,8,32], index: 0, kind: input, shape index: {}]
  %s1 = inlined_call_operand.hbm [shape: f32[4,8,32], index: 1, kind: input, shape index: {}]
  %s2 = inlined_call_operand.hbm [shape: f32[4,8,32], index: 2, kind: input, shape index: {}]
  %s3 = inlined_call_operand.hbm [shape: f32[4,8,32], index: 3, kind: output, shape index: {0}]
  %s4 = inlined_call_operand.hbm [shape: f32[4,8,8], index: 4, kind: output, shape index: {1}]
  %5 = xla_tuple %s3, %s4
  %s6 = sld [smem:[#allocation0]]
  $region65: #{tpu_custom_call.1} parent=0
    _
  %s8 = ssub.s32 1, %s6
  %s9 = scalar_select 0, %s8, %s6
  $region1: #{tpu_custom_call.1} parent=0
    #allocation2 [shape = 'u8[8192]{0}', space=vmem, size = 0x2000, scoped, tag = 'input window, operand 0']
    #allocation3 [shape = 's32[2]{0}', space=sflag, size = 0x8, scoped, tag = 'scoped memory for tpu_custom_call.1']
    #allocation4 [shape = 's32[2]{0}', space=sflag, size = 0x8, scoped, tag = 'scoped memory for tpu_custom_call.1']
    #allocation5 [shape = 'u8[8192]{0}', space=vmem, size = 0x2000, scoped, tag = 'input window, operand 1']
    #allocation6 [shape = 's32[2]{0}', space=sflag, size = 0x8, scoped, tag = 'scoped memory for tpu_custom_call.1']
    #allocation7 [shape = 'u8[8192]{0}', space=vmem, size = 0x2000, scoped, tag = 'input window, operand 2']
    #allocation8 [shape = 'u8[8192]{0}', space=vmem, size = 0x2000, scoped, tag = 'output window, operand 0']
    #allocation9 [shape = 'u8[8192]{0}', space=vmem, size = 0x2000, scoped, tag = 'output window, operand 1']
    #allocation10 [shape = 's32[2]{0}', space=sflag, size = 0x8, scoped, tag = 'scoped memory for tpu_custom_call.1']
    %10 = vsyncpa [#allocation3], 0
    %s11 = scalar_lea.sflag [#allocation3], 1
    %12 = vsyncpa %s11, 0
    %13 = vsyncpa [#allocation6], 0
    %s14 = scalar_lea.sflag [#allocation6], 1
    %15 = vsyncpa %s14, 0
    %16 = vsyncpa [#allocation4], 0
    %s17 = scalar_lea.sflag [#allocation4], 1
    %18 = vsyncpa %s17, 0
    %19 = vsyncpa [#allocation10], 0
    %s20 = scalar_lea.sflag [#allocation10], 1
    %21 = vsyncpa %s20, 0
    loop: start=0, step=1, limit=6
    $region2: #{tpu_custom_call.1} parent=1 // loop_pre_header
      _
    $region3: #{tpu_custom_call.1} parent=1 // loop_header
      %s23 = sphi 0, %s27
      %p24 = scmp.ge.s32.totalorder %s23, 6
      %s30 = sphi 0, %s42
      %s31 = sphi 0, %s38
      %s32 = sphi 0, %s30
      %s33 = sphi 0, %s31
      %s34 = sphi 0, %s32
      %s35 = sphi 0, %s33
      %s47 = sphi 0, %s49
      %s50 = sphi 0, %s47
      %s51 = sphi 0, %s50
      %s67 = sphi 0, %s51
      %s73 = sphi 0, %s75
      %s76 = sphi 0, %s73
      %s77 = sphi 0, %s76
      %s93 = sphi 0, %s77
      %s99 = sphi 0, %s101
      %s102 = sphi 0, %s99
      %s103 = sphi 0, %s102
      %s119 = sphi 0, %s103
      %s127 = sphi 0, %s129
      %s130 = sphi 0, %s127
      %s131 = sphi 0, %s130
      %s147 = sphi 0, %s131
      %s155 = sphi 0, %s157
      %s158 = sphi 0, %s155
      %s159 = sphi 0, %s158
      %s175 = sphi 0, %s159
    $region4: #{tpu_custom_call.1} parent=1 // loop_header_branch
      %26 = sbr.rel (%p24) target = $region8
    $region5: #{tpu_custom_call.1} parent=1 // loop_body
      %s28 = ssub.s32 %s23, 1
      %s29 = ssub.s32 %s23, 2
      %s36 = sadd.s32 1, %s31
      %p37 = scmp.ge.s32.totalorder %s36, 1
      %s38 = scalar_select %p37, 0, %s36
      %s39 = sadd.s32 1, %s30
      %s40 = scalar_select %p37, %s39, %s30
      %p41 = scmp.ge.s32.totalorder %s40, 4
      %s42 = scalar_select %p41, 0, %s40
      %s43 = ssub.s32 %s30, %s42
      %s44 = ssub.s32 %s31, %s38
      %s45 = sor.u32 %s43, %s44
      %p46 = scmp.eq.s32.totalorder %s45, 0
      %s48 = sadd.s32 %s47, 1
      %s49 = scalar_select %p46, %s47, %s48
      %p52 = pneg %p46
      %p53 = scmp.eq.s32.totalorder %s23, 3
      %p54 = por %p52, %p53
      %p55 = scmp.ne.s32.totalorder %s47, %s50
      %p56 = scmp.eq.s32.totalorder %s23, 0
      %p57 = por %p55, %p56
      %p58 = scmp.ne.s32.totalorder %s47, %s50
      %p59 = scmp.eq.s32.totalorder %s28, 3
      %p60 = por %p58, %p59
      %p61 = scmp.ne.s32.totalorder %s50, %s51
      %p62 = scmp.eq.s32.totalorder %s28, 0
      %p63 = por %p61, %p62
      %p64 = scmp.ne.s32.totalorder %s50, %s51
      %p65 = scmp.eq.s32.totalorder %s29, 3
      %p66 = por %p64, %p65
      %p68 = scmp.ne.s32.totalorder %s51, %s67
      %p69 = scmp.eq.s32.totalorder %s29, 0
      %p70 = por %p68, %p69
      %s71 = ssub.s32 %s30, %s42
      %p72 = scmp.eq.s32.totalorder %s71, 0
      %s74 = sadd.s32 %s73, 1
      %s75 = scalar_select %p72, %s73, %s74
      %p78 = pneg %p72
      %p79 = scmp.eq.s32.totalorder %s23, 3
      %p80 = por %p78, %p79
      %p81 = scmp.ne.s32.totalorder %s73, %s76
      %p82 = scmp.eq.s32.totalorder %s23, 0
      %p83 = por %p81, %p82
      %p84 = scmp.ne.s32.totalorder %s73, %s76
      %p85 = scmp.eq.s32.totalorder %s28, 3
      %p86 = por %p84, %p85
      %p87 = scmp.ne.s32.totalorder %s76, %s77
      %p88 = scmp.eq.s32.totalorder %s28, 0
      %p89 = por %p87, %p88
      %p90 = scmp.ne.s32.totalorder %s76, %s77
      %p91 = scmp.eq.s32.totalorder %s29, 3
      %p92 = por %p90, %p91
      %p94 = scmp.ne.s32.totalorder %s77, %s93
      %p95 = scmp.eq.s32.totalorder %s29, 0
      %p96 = por %p94, %p95
      %s97 = ssub.s32 %s30, %s42
      %p98 = scmp.eq.s32.totalorder %s97, 0
      %s100 = sadd.s32 %s99, 1
      %s101 = scalar_select %p98, %s99, %s100
      %p104 = pneg %p98
      %p105 = scmp.eq.s32.totalorder %s23, 3
      %p106 = por %p104, %p105
      %p107 = scmp.ne.s32.totalorder %s99, %s102
      %p108 = scmp.eq.s32.totalorder %s23, 0
      %p109 = por %p107, %p108
      %p110 = scmp.ne.s32.totalorder %s99, %s102
      %p111 = scmp.eq.s32.totalorder %s28, 3
      %p112 = por %p110, %p111
      %p113 = scmp.ne.s32.totalorder %s102, %s103
      %p114 = scmp.eq.s32.totalorder %s28, 0
      %p115 = por %p113, %p114
      %p116 = scmp.ne.s32.totalorder %s102, %s103
      %p117 = scmp.eq.s32.totalorder %s29, 3
      %p118 = por %p116, %p117
      %p120 = scmp.ne.s32.totalorder %s103, %s119
      %p121 = scmp.eq.s32.totalorder %s29, 0
      %p122 = por %p120, %p121
      %s123 = ssub.s32 %s30, %s42
      %s124 = ssub.s32 %s31, %s38
      %s125 = sor.u32 %s123, %s124
      %p126 = scmp.eq.s32.totalorder %s125, 0
      %s128 = sadd.s32 %s127, 1
      %s129 = scalar_select %p126, %s127, %s128
      %p132 = pneg %p126
      %p133 = scmp.eq.s32.totalorder %s23, 3
      %p134 = por %p132, %p133
      %p135 = scmp.ne.s32.totalorder %s127, %s130
      %p136 = scmp.eq.s32.totalorder %s23, 0
      %p137 = por %p135, %p136
      %p138 = scmp.ne.s32.totalorder %s127, %s130
      %p139 = scmp.eq.s32.totalorder %s28, 3
      %p140 = por %p138, %p139
      %p141 = scmp.ne.s32.totalorder %s130, %s131
      %p142 = scmp.eq.s32.totalorder %s28, 0
      %p143 = por %p141, %p142
      %p144 = scmp.ne.s32.totalorder %s130, %s131
      %p145 = scmp.eq.s32.totalorder %s29, 3
      %p146 = por %p144, %p145
      %p148 = scmp.ne.s32.totalorder %s131, %s147
      %p149 = scmp.eq.s32.totalorder %s29, 0
      %p150 = por %p148, %p149
      %s151 = ssub.s32 %s30, %s42
      %s152 = ssub.s32 %s31, %s38
      %s153 = sor.u32 %s151, %s152
      %p154 = scmp.eq.s32.totalorder %s153, 0
      %s156 = sadd.s32 %s155, 1
      %s157 = scalar_select %p154, %s155, %s156
      %p160 = pneg %p154
      %p161 = scmp.eq.s32.totalorder %s23, 3
      %p162 = por %p160, %p161
      %p163 = scmp.ne.s32.totalorder %s155, %s158
      %p164 = scmp.eq.s32.totalorder %s23, 0
      %p165 = por %p163, %p164
      %p166 = scmp.ne.s32.totalorder %s155, %s158
      %p167 = scmp.eq.s32.totalorder %s28, 3
      %p168 = por %p166, %p167
      %p169 = scmp.ne.s32.totalorder %s158, %s159
      %p170 = scmp.eq.s32.totalorder %s28, 0
      %p171 = por %p169, %p170
      %p172 = scmp.ne.s32.totalorder %s158, %s159
      %p173 = scmp.eq.s32.totalorder %s29, 3
      %p174 = por %p172, %p173
      %p176 = scmp.ne.s32.totalorder %s159, %s175
      %p177 = scmp.eq.s32.totalorder %s29, 0
      %p178 = por %p176, %p177
      %p179 = scmp.le.s32.totalorder 1, %s23
      %p180 = scmp.lt.s32.totalorder %s23, 5
      %p181 = pnand %p179, %p180
      %p182 = pneg %p181
      // Predicated region
      $region9: #{tpu_custom_call.1} parent=5 // pred_check
        _
      $region10: #{tpu_custom_call.1} parent=5 // pred_check_branch
        %184 = sbr.rel (%p181) target = $region12
      $region11: #{tpu_custom_call.1} parent=5 // pred_region
        %s185 = ssub.s32 %s23, 1
      $region12: #{tpu_custom_call.1} parent=5 // pred_fallthru
        _
      %p186 = scmp.lt.s32.totalorder %s23, 4
      // Predicated region
      $region13: #{tpu_custom_call.1} parent=5 // pred_check
        %p187 = pneg %p186
      $region14: #{tpu_custom_call.1} parent=5 // pred_check_branch
        %189 = sbr.rel (%p187) target = $region16
      $region15: #{tpu_custom_call.1} parent=5 // pred_region
        // Predicated region
        $region17: #{tpu_custom_call.1} parent=15 // pred_check
          %p190 = pneg %p57
        $region18: #{tpu_custom_call.1} parent=15 // pred_check_branch
          %192 = sbr.rel (%p190) target = $region20
        $region19: #{tpu_custom_call.1} parent=15 // pred_region
          %s193 = sand.u32 %s47, 1
          %s194 = scalar_lea.sflag [#allocation3], %s193
          %s195 = sand.u32 %s47, 1
          %s196 = smul.addr %s195, 8
          %s197 = scalar_lea.vmem [#allocation2], %s196
          %s199 = ssub.s32 128, 128
          %200 = vsyncadd %s194, %s199
          %s201 = sadd.s32 %s31, %s30
          %s202 = smul.addr %s201, 128
          %s203 = scalar_lea.hbm %s0, %s202
          %s205 = sshll.u32 %s197, 4
          %s206 = int_to_ptr.vmem [resolvable:$true] %s205
          %208 = dma.hbm_to_vmem [thread:$0]  %s203, 128, %s206, %s194
        $region20: #{tpu_custom_call.1} parent=15 // pred_fallthru
          _
        // Predicated region
        $region21: #{tpu_custom_call.1} parent=15 // pred_check
          %p209 = pneg %p83
        $region22: #{tpu_custom_call.1} parent=15 // pred_check_branch
          %211 = sbr.rel (%p209) target = $region24
        $region23: #{tpu_custom_call.1} parent=15 // pred_region
          %s212 = sand.u32 %s23, 1
          %s213 = scalar_lea.sflag [#allocation6], %s212
          %s214 = sand.u32 %s73, 1
          %s215 = smul.addr %s214, 8
          %s216 = scalar_lea.vmem [#allocation5], %s215
          %s218 = ssub.s32 128, 128
          %219 = vsyncadd %s213, %s218
          %s220 = smul.addr %s30, 128
          %s221 = scalar_lea.hbm %s1, %s220
          %s223 = sshll.u32 %s216, 4
          %s224 = int_to_ptr.vmem [resolvable:$true] %s223
          %226 = dma.hbm_to_vmem [thread:$0]  %s221, 128, %s224, %s213
        $region24: #{tpu_custom_call.1} parent=15 // pred_fallthru
          _
        // Predicated region
        $region25: #{tpu_custom_call.1} parent=15 // pred_check
          %p227 = pneg %p109
        $region26: #{tpu_custom_call.1} parent=15 // pred_check_branch
          %229 = sbr.rel (%p227) target = $region28
        $region27: #{tpu_custom_call.1} parent=15 // pred_region
          %s230 = sand.u32 %s23, 1
          %s231 = scalar_lea.sflag [#allocation6], %s230
          %s232 = sand.u32 %s99, 1
          %s233 = smul.addr %s232, 8
          %s234 = scalar_lea.vmem [#allocation7], %s233
          %s236 = ssub.s32 128, 128
          %237 = vsyncadd %s231, %s236
          %s238 = smul.addr %s30, 128
          %s239 = scalar_lea.hbm %s2, %s238
          %s241 = sshll.u32 %s234, 4
          %s242 = int_to_ptr.vmem [resolvable:$true] %s241
          %244 = dma.hbm_to_vmem [thread:$0]  %s239, 128, %s242, %s231
        $region28: #{tpu_custom_call.1} parent=15 // pred_fallthru
          _
      $region16: #{tpu_custom_call.1} parent=5 // pred_fallthru
        _
      %p245 = scmp.le.s32.totalorder 1, %s23
      %p246 = scmp.lt.s32.totalorder %s23, 5
      %p247 = pnand %p245, %p246
      %p248 = pneg %p247
      // Predicated region
      $region29: #{tpu_custom_call.1} parent=5 // pred_check
        _
      $region30: #{tpu_custom_call.1} parent=5 // pred_check_branch
        %250 = sbr.rel (%p247) target = $region32
      $region31: #{tpu_custom_call.1} parent=5 // pred_region
        %s251 = ssub.s32 %s23, 1
        %s252 = sand.u32 %s50, 1
        %s253 = scalar_lea.sflag [#allocation3], %s252
        %s254 = sand.u32 %s50, 1
        %s255 = smul.addr %s254, 8
        %s256 = scalar_lea.vmem [#allocation2], %s255
        // Predicated region
        $region33: #{tpu_custom_call.1} parent=31 // pred_check
          %p257 = pneg %p63
        $region34: #{tpu_custom_call.1} parent=31 // pred_check_branch
          %259 = sbr.rel (%p257) target = $region36
        $region35: #{tpu_custom_call.1} parent=31 // pred_region
          %260 = dma.done %s253, 128
        $region36: #{tpu_custom_call.1} parent=31 // pred_fallthru
          _
        %s261 = sand.u32 %s28, 1
        %s262 = scalar_lea.sflag [#allocation6], %s261
        %s263 = sand.u32 %s76, 1
        %s264 = smul.addr %s263, 8
        %s265 = scalar_lea.vmem [#allocation5], %s264
        // Predicated region
        $region37: #{tpu_custom_call.1} parent=31 // pred_check
          %p266 = pneg %p89
        $region38: #{tpu_custom_call.1} parent=31 // pred_check_branch
          %268 = sbr.rel (%p266) target = $region40
        $region39: #{tpu_custom_call.1} parent=31 // pred_region
          %269 = dma.done %s262, 128
        $region40: #{tpu_custom_call.1} parent=31 // pred_fallthru
          _
        %s270 = sand.u32 %s28, 1
        %s271 = scalar_lea.sflag [#allocation6], %s270
        %s272 = sand.u32 %s102, 1
        %s273 = smul.addr %s272, 8
        %s274 = scalar_lea.vmem [#allocation7], %s273
        // Predicated region
        $region41: #{tpu_custom_call.1} parent=31 // pred_check
          %p275 = pneg %p115
        $region42: #{tpu_custom_call.1} parent=31 // pred_check_branch
          %277 = sbr.rel (%p275) target = $region44
        $region43: #{tpu_custom_call.1} parent=31 // pred_region
          %278 = dma.done %s271, 128
        $region44: #{tpu_custom_call.1} parent=31 // pred_fallthru
          _
        %s279 = sand.u32 %s50, 1
        %s280 = scalar_lea.sflag [#allocation3], %s279
        %s281 = sand.u32 %s50, 1
        %s282 = smul.addr %s281, 8
        %s283 = scalar_lea.vmem [#allocation2], %s282
        %p284 = pneg %p63
        %p285 = pneg %p60
        %s286 = sand.u32 %s28, 1
        %s287 = scalar_lea.sflag [#allocation6], %s286
        %s288 = sand.u32 %s76, 1
        %s289 = smul.addr %s288, 8
        %s290 = scalar_lea.vmem [#allocation5], %s289
        %p291 = pneg %p89
        %p292 = pneg %p86
        %s293 = sand.u32 %s28, 1
        %s294 = scalar_lea.sflag [#allocation6], %s293
        %s295 = sand.u32 %s102, 1
        %s296 = smul.addr %s295, 8
        %s297 = scalar_lea.vmem [#allocation7], %s296
        %p298 = pneg %p115
        %p299 = pneg %p112
        %p300 = pneg %p143
        %p301 = pneg %p140
        %s302 = sand.u32 %s130, 1
        %s303 = scalar_lea.sflag [#allocation4], %s302
        %s304 = sand.u32 %s130, 1
        %s305 = smul.addr %s304, 8
        %s306 = scalar_lea.vmem [#allocation8], %s305
        %p307 = pneg %p171
        %p308 = pneg %p168
        %s309 = sand.u32 %s158, 1
        %s310 = scalar_lea.sflag [#allocation10], %s309
        %s311 = sand.u32 %s158, 1
        %s312 = smul.addr %s311, 8
        %s313 = scalar_lea.vmem [#allocation9], %s312
        %v314 = vld [vmem:[%s256] sm:$0xff]
        %v315 = vmul.f32 %v314, 0.17677669
        %v316 = vld [vmem:[%s265] sm:$0xff]
        %vm317 = vcmask 261120
        %v319 = vsel %vm317, %v315, 0
        %v322 = vsel %vm317, %v316, 0
        %324 = vmatprep.subr.mxu0 0.0
        %325 = vmatpush1.xpose.msra.mxu0 0.0
        %326 = vmatprep.subr.mxu0 0.0
        %327 = vmatpush1.xpose.msra.mxu0 0.0
        %328 = vmatprep.subr.mxu0 0.0
        %329 = vmatpush1.xpose.msra.mxu0 0.0
        %330 = vmatprep.subr.mxu0 0.0
        %331 = vmatpush1.xpose.msra.mxu0 0.0
        %332 = vmatprep.subr.mxu0 0.0
        %333 = vmatpush1.xpose.msra.mxu0 0.0
        %334 = vmatprep.subr.mxu0 0.0
        %335 = vmatpush1.xpose.msra.mxu0 0.0
        %336 = vmatprep.subr.mxu0 0.0
        %337 = vmatpush1.xpose.msra.mxu0 0.0
        %338 = vmatprep.subr.mxu0 0.0
        %339 = vmatpush1.xpose.msra.mxu0 0.0
        %340 = vmatprep.subr.mxu0 0.0
        %341 = vmatpush1.xpose.msra.mxu0 0.0
        %342 = vmatprep.subr.mxu0 0.0
        %343 = vmatpush1.xpose.msra.mxu0 0.0
        %344 = vmatprep.subr.mxu0 0.0
        %345 = vmatpush1.xpose.msra.mxu0 0.0
        %346 = vmatprep.subr.mxu0 0.0
        %347 = vmatpush1.xpose.msra.mxu0 0.0
        %348 = vmatprep.subr.mxu0 0.0
        %349 = vmatpush1.xpose.msra.mxu0 0.0
        %350 = vmatprep.subr.mxu0 0.0
        %351 = vmatpush1.xpose.msra.mxu0 0.0
        %352 = vmatprep.subr.mxu0 0.0
        %353 = vmatpush1.xpose.msra.mxu0 0.0
        %354 = vmatprep.subr.mxu0 0.0
        %355 = vmatpush1.xpose.msra.mxu0 %v322
        %356 = vmatprep.subr.mxu0 0.0
        %357 = vmatpush2.xpose.msra.mxu0 0.0
        %358 = vmatprep.subr.mxu0 0.0
        %359 = vmatpush2.xpose.msra.mxu0 0.0
        %360 = vmatprep.subr.mxu0 0.0
        %361 = vmatpush2.xpose.msra.mxu0 0.0
        %362 = vmatprep.subr.mxu0 0.0
        %363 = vmatpush2.xpose.msra.mxu0 0.0
        %364 = vmatprep.subr.mxu0 0.0
        %365 = vmatpush2.xpose.msra.mxu0 0.0
        %366 = vmatprep.subr.mxu0 0.0
        %367 = vmatpush2.xpose.msra.mxu0 0.0
        %368 = vmatprep.subr.mxu0 0.0
        %369 = vmatpush2.xpose.msra.mxu0 0.0
        %370 = vmatprep.subr.mxu0 0.0
        %371 = vmatpush2.xpose.msra.mxu0 0.0
        %372 = vmatprep.subr.mxu0 0.0
        %373 = vmatpush2.xpose.msra.mxu0 0.0
        %374 = vmatprep.subr.mxu0 0.0
        %375 = vmatpush2.xpose.msra.mxu0 0.0
        %376 = vmatprep.subr.mxu0 0.0
        %377 = vmatpush2.xpose.msra.mxu0 0.0
        %378 = vmatprep.subr.mxu0 0.0
        %379 = vmatpush2.xpose.msra.mxu0 0.0
        %380 = vmatprep.subr.mxu0 0.0
        %381 = vmatpush2.xpose.msra.mxu0 0.0
        %382 = vmatprep.subr.mxu0 0.0
        %383 = vmatpush2.xpose.msra.mxu0 0.0
        %384 = vmatprep.subr.mxu0 0.0
        %385 = vmatpush2.xpose.msra.mxu0 0.0
        %386 = vmatprep.subr.mxu0 0.0
        %387 = vmatpush2.xpose.msra.mxu0 0.0
        %388 = vmatprep.mubr.f32.mxu0 0.0
        %389 = vmatmul.mubr.f32.gmra.mxu0 %v319
        %v390 = vpop.f32.mrf.mxu0
        %v391 = vadd.f32 0.0, %v390
        %v392 = vpop.f32.mrf.mxu0
        %393 = vdwg.mxu0
        %vm394 = vcmask 64512
        %v395 = vsel %vm394, %v391, -inf
        %396 = vmax.xlane.f32.xlu0 %v395
        %v397 = vpop.xlane.xlu0 %396
        %v398 = vsub.f32 %v391, %v397
        %v399 = vmul.f32 %v398, 1.442695
        %v400 = vpow.pop %v399
        %v401 = vsel %vm394, %v400, 0.0
        %402 = vadd.xlane.f32.xlu0 %v401
        %v403 = vpop.xlane.xlu0 %402
        %v404 = vrcp.pop %v403
        %v405 = vmul.f32 %v400, %v404
        %406 = vst.msk [vmem:[%s313] sm:$0xff] %vm394, %v405
        %v407 = vld [vmem:[%s274] sm:$0xff]
        %v409 = vsel %vm394, %v405, 0
        %411 = vmatprep.subr.mxu0 0.0
        %412 = vmatpush1.msra.mxu0 0.0
        %413 = vmatprep.subr.mxu0 0.0
        %414 = vmatpush1.msra.mxu0 0.0
        %415 = vmatprep.subr.mxu0 0.0
        %416 = vmatpush1.msra.mxu0 0.0
        %417 = vmatprep.subr.mxu0 0.0
        %418 = vmatpush1.msra.mxu0 0.0
        %419 = vmatprep.subr.mxu0 0.0
        %420 = vmatpush1.msra.mxu0 0.0
        %421 = vmatprep.subr.mxu0 0.0
        %422 = vmatpush1.msra.mxu0 0.0
        %423 = vmatprep.subr.mxu0 0.0
        %424 = vmatpush1.msra.mxu0 0.0
        %425 = vmatprep.subr.mxu0 0.0
        %426 = vmatpush1.msra.mxu0 0.0
        %427 = vmatprep.subr.mxu0 0.0
        %428 = vmatpush1.msra.mxu0 0.0
        %429 = vmatprep.subr.mxu0 0.0
        %430 = vmatpush1.msra.mxu0 0.0
        %431 = vmatprep.subr.mxu0 0.0
        %432 = vmatpush1.msra.mxu0 0.0
        %433 = vmatprep.subr.mxu0 0.0
        %434 = vmatpush1.msra.mxu0 0.0
        %435 = vmatprep.subr.mxu0 0.0
        %436 = vmatpush1.msra.mxu0 0.0
        %437 = vmatprep.subr.mxu0 0.0
        %438 = vmatpush1.msra.mxu0 0.0
        %439 = vmatprep.subr.mxu0 0.0
        %440 = vmatpush1.msra.mxu0 0.0
        %441 = vmatprep.subr.mxu0 0.0
        %442 = vmatpush1.msra.mxu0 %v407
        %443 = vmatprep.subr.mxu0 0.0
        %444 = vmatpush2.msra.mxu0 0.0
        %445 = vmatprep.subr.mxu0 0.0
        %446 = vmatpush2.msra.mxu0 0.0
        %447 = vmatprep.subr.mxu0 0.0
        %448 = vmatpush2.msra.mxu0 0.0
        %449 = vmatprep.subr.mxu0 0.0
        %450 = vmatpush2.msra.mxu0 0.0
        %451 = vmatprep.subr.mxu0 0.0
        %452 = vmatpush2.msra.mxu0 0.0
        %453 = vmatprep.subr.mxu0 0.0
        %454 = vmatpush2.msra.mxu0 0.0
        %455 = vmatprep.subr.mxu0 0.0
        %456 = vmatpush2.msra.mxu0 0.0
        %457 = vmatprep.subr.mxu0 0.0
        %458 = vmatpush2.msra.mxu0 0.0
        %459 = vmatprep.subr.mxu0 0.0
        %460 = vmatpush2.msra.mxu0 0.0
        %461 = vmatprep.subr.mxu0 0.0
        %462 = vmatpush2.msra.mxu0 0.0
        %463 = vmatprep.subr.mxu0 0.0
        %464 = vmatpush2.msra.mxu0 0.0
        %465 = vmatprep.subr.mxu0 0.0
        %466 = vmatpush2.msra.mxu0 0.0
        %467 = vmatprep.subr.mxu0 0.0
        %468 = vmatpush2.msra.mxu0 0.0
        %469 = vmatprep.subr.mxu0 0.0
        %470 = vmatpush2.msra.mxu0 0.0
        %471 = vmatprep.subr.mxu0 0.0
        %472 = vmatpush2.msra.mxu0 0.0
        %473 = vmatprep.subr.mxu0 0.0
        %474 = vmatpush2.msra.mxu0 0.0
        %475 = vmatprep.mubr.f32.mxu0 0.0
        %476 = vmatmul.mubr.f32.gmra.mxu0 %v409
        %v477 = vpop.f32.mrf.mxu0
        %v478 = vadd.f32 0.0, %v477
        %v479 = vpop.f32.mrf.mxu0
        %480 = vdwg.mxu0
        %481 = vst.msk [vmem:[%s306] sm:$0xff] %vm317, %v478
        %s482 = sand.u32 %s130, 1
        %s483 = scalar_lea.sflag [#allocation4], %s482
        %s484 = sand.u32 %s130, 1
        %s485 = smul.addr %s484, 8
        %s486 = scalar_lea.vmem [#allocation8], %s485
        %s487 = sand.u32 %s158, 1
        %s488 = scalar_lea.sflag [#allocation10], %s487
        %s489 = sand.u32 %s158, 1
        %s490 = smul.addr %s489, 8
        %s491 = scalar_lea.vmem [#allocation9], %s490
        // Predicated region
        $region45: #{tpu_custom_call.1} parent=31 // pred_check
          %p492 = pneg %p140
        $region46: #{tpu_custom_call.1} parent=31 // pred_check_branch
          %494 = sbr.rel (%p492) target = $region48
        $region47: #{tpu_custom_call.1} parent=31 // pred_region
          %s496 = ssub.s32 128, 128
          %497 = vsyncadd %s483, %s496
          %s498 = sadd.s32 %s33, %s32
          %s499 = smul.addr %s498, 128
          %s500 = scalar_lea.hbm %s3, %s499
          %s502 = sshll.u32 %s486, 4
          %s503 = int_to_ptr.vmem [resolvable:$true] %s502
          %505 = dma.vmem_to_hbm [thread:$0]  %s503, 128, %s500, %s483
        $region48: #{tpu_custom_call.1} parent=31 // pred_fallthru
          _
        // Predicated region
        $region49: #{tpu_custom_call.1} parent=31 // pred_check
          %p506 = pneg %p168
        $region50: #{tpu_custom_call.1} parent=31 // pred_check_branch
          %508 = sbr.rel (%p506) target = $region52
        $region51: #{tpu_custom_call.1} parent=31 // pred_region
          %s510 = ssub.s32 128, 128
          %511 = vsyncadd %s488, %s510
          %s512 = sadd.s32 %s33, %s32
          %s513 = smul.addr %s512, 128
          %s514 = scalar_lea.hbm %s4, %s513
          %s516 = sshll.u32 %s491, 4
          %s517 = int_to_ptr.vmem [resolvable:$true] %s516
          %519 = dma.vmem_to_hbm [thread:$0]  %s517, 128, %s514, %s488
        $region52: #{tpu_custom_call.1} parent=31 // pred_fallthru
          _
      $region32: #{tpu_custom_call.1} parent=5 // pred_fallthru
        _
      %p520 = scmp.le.s32.totalorder 2, %s23
      // Predicated region
      $region53: #{tpu_custom_call.1} parent=5 // pred_check
        %p521 = pneg %p520
      $region54: #{tpu_custom_call.1} parent=5 // pred_check_branch
        %523 = sbr.rel (%p521) target = $region56
      $region55: #{tpu_custom_call.1} parent=5 // pred_region
        %s524 = ssub.s32 %s23, 2
        // Predicated region
        $region57: #{tpu_custom_call.1} parent=55 // pred_check
          %p525 = pneg %p146
        $region58: #{tpu_custom_call.1} parent=55 // pred_check_branch
          %527 = sbr.rel (%p525) target = $region60
        $region59: #{tpu_custom_call.1} parent=55 // pred_region
          %s528 = sand.u32 %s131, 1
          %s529 = scalar_lea.sflag [#allocation4], %s528
          %s530 = sand.u32 %s131, 1
          %s531 = smul.addr %s530, 8
          %s532 = scalar_lea.vmem [#allocation8], %s531
          %533 = dma.done %s529, 128
        $region60: #{tpu_custom_call.1} parent=55 // pred_fallthru
          _
        // Predicated region
        $region61: #{tpu_custom_call.1} parent=55 // pred_check
          %p534 = pneg %p174
        $region62: #{tpu_custom_call.1} parent=55 // pred_check_branch
          %536 = sbr.rel (%p534) target = $region64
        $region63: #{tpu_custom_call.1} parent=55 // pred_region
          %s537 = sand.u32 %s159, 1
          %s538 = scalar_lea.sflag [#allocation10], %s537
          %s539 = sand.u32 %s159, 1
          %s540 = smul.addr %s539, 8
          %s541 = scalar_lea.vmem [#allocation9], %s540
          %542 = dma.done %s538, 128
        $region64: #{tpu_custom_call.1} parent=55 // pred_fallthru
          _
      $region56: #{tpu_custom_call.1} parent=5 // pred_fallthru
        _
    $region6: #{tpu_custom_call.1} parent=1 // loop_footer
      %s27 = sadd.s32 1, %s23
    $region7: #{tpu_custom_call.1} parent=1 // loop_footer_branch
      %22 = sbr.rel target = $region3
    $region8: #{tpu_custom_call.1} parent=1 // loop_exit
      _
    %543 = vsyncpa [#allocation3], 1
    %s544 = scalar_lea.sflag [#allocation3], 1
    %545 = vsyncpa %s544, 1
    %546 = vsyncpa [#allocation6], 1
    %s547 = scalar_lea.sflag [#allocation6], 1
    %548 = vsyncpa %s547, 1
    %549 = vsyncpa [#allocation4], 1
    %s550 = scalar_lea.sflag [#allocation4], 1
    %551 = vsyncpa %s550, 1
    %552 = vsyncpa [#allocation10], 1
    %s553 = scalar_lea.sflag [#allocation10], 1
    %554 = vsyncpa %s553, 1

</llo_original>
